<compile_context>
chip_gen: v5e
topology: v5e:2x2
jax: 0.10.0
libtpu: 0.0.40
codegen_flags: <defaults>
</compile_context>

<pallas_src>
import functools
import math

import jax
import jax.numpy as jnp
from jax import lax
from jax.experimental import pallas as pl
from jax.experimental.pallas import tpu as pltpu


def _mha_kernel(qkv_ref, w_ref, b_ref, wo_ref, bo_ref, out_ref, *, d_head, mxu_dtype):
    # qkv_ref: [3, H, N, d_head]   packed (q, k, v), head-batched
    # w_ref:   [3, H, d_head, d_head]  pre-transposed so x @ W == PyTorch x @ W.T
    # b_ref:   [3, H, 1, d_head]
    # wo_ref:  [H, d_head, dmodel]     output Linear weight, rows split per head
    # bo_ref:  [1, dmodel]
    # out_ref: [N, dmodel]
    scale = 1.0 / math.sqrt(d_head)

    # Batched per-head Linear projections: [H,N,d] @ [H,d,d] -> [H,N,d].
    dn_proj = (((2,), (1,)), ((0,), (0,)))

    def proj(i):  # i is a static Python int (0=q, 1=k, 2=v)
        x = qkv_ref[i].astype(mxu_dtype)
        w = w_ref[i].astype(mxu_dtype)
        return lax.dot_general(x, w, dn_proj, preferred_element_type=jnp.float32) + b_ref[i]

    qp = proj(0) * scale          # fold 1/sqrt(d_head) into q once ([H,N,d], not [H,N,N])
    kp = proj(1)
    vp = proj(2)

    # Scores for all heads at once, contracting the last dims (no k^T copy): [H,N,N].
    dn_qkT = (((2,), (2,)), ((0,), (0,)))
    s = lax.dot_general(qp.astype(mxu_dtype), kp.astype(mxu_dtype), dn_qkT,
                        preferred_element_type=jnp.float32)

    # Softmax stats in f32; normalization deferred until after the PV matmul.
    m = jnp.max(s, axis=2, keepdims=True)
    e = jnp.exp(s - m)
    denom = jnp.sum(e, axis=2, keepdims=True)                      # [H,N,1]

    # P @ V batched over heads: [H,N,N] @ [H,N,d] -> [H,N,d].
    dn_pv = (((2,), (1,)), ((0,), (0,)))
    att = lax.dot_general(e.astype(mxu_dtype), vp.astype(mxu_dtype), dn_pv,
                          preferred_element_type=jnp.float32)

    # EUP approximate reciprocal + one Newton-Raphson step (~f32 accuracy, off the VPU path).
    r = pl.reciprocal(denom, approx=True)
    r = r * (2.0 - denom * r)
    att = att * r                                                   # [H,N,1] broadcast divide

    # Output Linear: batched [H,N,d] @ [H,d,dmodel] -> [H,N,dmodel], then sum over heads.
    # This fuses the head concatenation and W_out with no transpose / concat in the kernel.
    dn_out = (((2,), (1,)), ((0,), (0,)))
    out_h = lax.dot_general(att.astype(mxu_dtype), wo_ref[...].astype(mxu_dtype), dn_out,
                            preferred_element_type=jnp.float32)
    out = jnp.sum(out_h, axis=0) + bo_ref[...]                      # [N, dmodel]

    # TODO(synk): output is dmodel=16 wide (16/128 lanes, masked vst); lane-dense padding
    # only pays off once multiple sequences are batched per call.
    out_ref[...] = out.astype(out_ref.dtype)


def multi_attention(q, k, v, params, *, mxu_dtype=jnp.float32):
    wq, wk, wv = params["wq"], params["wk"], params["wv"]    # [H, d_head, d_head]
    bq, bk, bv = params["bq"], params["bk"], params["bv"]    # [H, 1, d_head]
    wo, bo = params["wo"], params["bo"]                      # [dmodel, dmodel], [1, dmodel]

    N, dmodel = q.shape
    H, d_head, _ = wq.shape
    assert dmodel == H * d_head
    assert d_head == H, "original module only well-formed for dmodel == heads**2"

    def to_heads(x):  # [N, dmodel] -> [H, N, d_head]
        return x.reshape(N, H, d_head).transpose(1, 0, 2)

    # Pack operands: 5 kernel inputs instead of 11 (fewer tiny DMA setups).
    qkv = jnp.stack([to_heads(q), to_heads(k), to_heads(v)])        # [3, H, N, d_head]
    w_qkv = jnp.stack([wq, wk, wv])                                 # [3, H, d_head, d_head]
    b_qkv = jnp.stack([bq, bk, bv])                                 # [3, H, 1, d_head]
    wo_r = wo.reshape(H, d_head, dmodel)                            # rows h*d_head+d -> (h, d)

    kernel = functools.partial(_mha_kernel, d_head=d_head, mxu_dtype=mxu_dtype)
    vspec = lambda: pl.BlockSpec(memory_space=pltpu.MemorySpace.VMEM)

    return pl.pallas_call(
        kernel,
        out_shape=jax.ShapeDtypeStruct((N, dmodel), jnp.float32),
        in_specs=[vspec() for _ in range(5)],
        out_specs=vspec(),
    )(qkv, w_qkv, b_qkv, wo_r, bo)


def multi_attention_ref(q, k, v, params):
    """Pure-JAX reference mirroring the PyTorch forward exactly."""
    H, d_head, _ = params["wq"].shape
    outs = []
    for h in range(H):
        qs = q[:, h * d_head:(h + 1) * d_head]
        ks = k[:, h * d_head:(h + 1) * d_head]
        vs = v[:, h * d_head:(h + 1) * d_head]
        qp = qs @ params["wq"][h] + params["bq"][h, 0]
        kp = ks @ params["wk"][h] + params["bk"][h, 0]
        vp = vs @ params["wv"][h] + params["bv"][h, 0]
        s = (qp @ kp.T) / jnp.sqrt(jnp.float32(d_head))
        p = jax.nn.softmax(s, axis=1)
        outs.append(p @ vp)
    cat = jnp.concatenate(outs, axis=1)
    return cat @ params["wo"] + params["bo"][0]


def init_params(key, dmodel, heads):
    d_head = dmodel // heads
    ks = jax.random.split(key, 8)
    bound_h = 1.0 / math.sqrt(d_head)
    bound_o = 1.0 / math.sqrt(dmodel)

    def u(k, shape, bound):
        return jax.random.uniform(k, shape, jnp.float32, -bound, bound)

    return {
        # Weights stored pre-transposed so the kernel computes x @ W  (== PyTorch x @ W.T).
        "wq": u(ks[0], (heads, d_head, d_head), bound_h),
        "wk": u(ks[1], (heads, d_head, d_head), bound_h),
        "wv": u(ks[2], (heads, d_head, d_head), bound_h),
        "bq": u(ks[3], (heads, 1, d_head), bound_h),
        "bk": u(ks[4], (heads, 1, d_head), bound_h),
        "bv": u(ks[5], (heads, 1, d_head), bound_h),
        "wo": u(ks[6], (dmodel, dmodel), bound_o),
        "bo": u(ks[7], (1, dmodel), bound_o),
    }


if __name__ == "__main__":
    heads = 4
    dmodel = heads * heads      # module only well-formed for dmodel = heads**2
    N = 8                       # sequence length

    key = jax.random.PRNGKey(0)
    kq, kk, kv, kp = jax.random.split(key, 4)
    q = jax.random.normal(kq, (N, dmodel), jnp.float32)
    k = jax.random.normal(kk, (N, dmodel), jnp.float32)
    v = jax.random.normal(kv, (N, dmodel), jnp.float32)
    params = init_params(kp, dmodel, heads)

    out = multi_attention(q, k, v, params)
    out = jax.block_until_ready(out)

    ref = multi_attention_ref(q, k, v, params)
    assert out.shape == (N, dmodel)
    assert jnp.allclose(out, ref, rtol=1e-4, atol=1e-5), "Pallas kernel mismatch vs reference"

    print("KERNEL_OK")
</pallas_src>

<mosaic_0001>
module attributes {stable_mosaic.version = 11 : i64} {
  func.func @_mha_kernel(%arg0: memref<3x4x8x4xf32, #tpu.memory_space<vmem>>, %arg1: memref<3x4x4x4xf32, #tpu.memory_space<vmem>>, %arg2: memref<3x4x1x4xf32, #tpu.memory_space<vmem>>, %arg3: memref<4x4x16xf32, #tpu.memory_space<vmem>>, %arg4: memref<1x16xf32, #tpu.memory_space<vmem>>, %arg5: memref<8x16xf32, #tpu.memory_space<vmem>>) attributes {dimension_semantics = [], scalar_prefetch = 0 : i64, scratch_operands = 0 : i64, tpu.core_type = #tpu.core_type<tc>} {
    %c0 = arith.constant 0 : index
    %c0_0 = arith.constant 0 : index
    %c0_1 = arith.constant 0 : index
    %c0_2 = arith.constant 0 : index
    %0 = vector.load %arg0[%c0, %c0_0, %c0_1, %c0_2] : memref<3x4x8x4xf32, #tpu.memory_space<vmem>>, vector<1x4x8x4xf32>
    %1 = vector.shape_cast %0 : vector<1x4x8x4xf32> to vector<4x8x4xf32>
    %c0_3 = arith.constant 0 : index
    %c0_4 = arith.constant 0 : index
    %c0_5 = arith.constant 0 : index
    %c0_6 = arith.constant 0 : index
    %2 = vector.load %arg1[%c0_3, %c0_4, %c0_5, %c0_6] : memref<3x4x4x4xf32, #tpu.memory_space<vmem>>, vector<1x4x4x4xf32>
    %3 = vector.shape_cast %2 : vector<1x4x4x4xf32> to vector<4x4x4xf32>
    %cst = arith.constant dense<0.000000e+00> : vector<4x8x4xf32>
    %4 = tpu.matmul %1, %3, %cst {dimension_numbers = #tpu.dot_dimension_numbers<[2], [1], [1], [2], [0, 0, 0, 1, 1, 2], [0], [0]>} : vector<4x8x4xf32>, vector<4x4x4xf32>, vector<4x8x4xf32> -> vector<4x8x4xf32>
    %c0_7 = arith.constant 0 : index
    %c0_8 = arith.constant 0 : index
    %c0_9 = arith.constant 0 : index
    %c0_10 = arith.constant 0 : index
    %5 = vector.load %arg2[%c0_7, %c0_8, %c0_9, %c0_10] : memref<3x4x1x4xf32, #tpu.memory_space<vmem>>, vector<1x4x1x4xf32>
    %6 = vector.shape_cast %5 : vector<1x4x1x4xf32> to vector<4x1x4xf32>
    %7 = vector.broadcast %6 : vector<4x1x4xf32> to vector<4x8x4xf32>
    %8 = arith.addf %4, %7 : vector<4x8x4xf32>
    %cst_11 = arith.constant 5.000000e-01 : f32
    %9 = vector.broadcast %cst_11 : f32 to vector<4x8x4xf32>
    %10 = arith.mulf %8, %9 : vector<4x8x4xf32>
    %c1 = arith.constant 1 : index
    %c0_12 = arith.constant 0 : index
    %c0_13 = arith.constant 0 : index
    %c0_14 = arith.constant 0 : index
    %11 = vector.load %arg0[%c1, %c0_12, %c0_13, %c0_14] : memref<3x4x8x4xf32, #tpu.memory_space<vmem>>, vector<1x4x8x4xf32>
    %12 = vector.shape_cast %11 : vector<1x4x8x4xf32> to vector<4x8x4xf32>
    %c1_15 = arith.constant 1 : index
    %c0_16 = arith.constant 0 : index
    %c0_17 = arith.constant 0 : index
    %c0_18 = arith.constant 0 : index
    %13 = vector.load %arg1[%c1_15, %c0_16, %c0_17, %c0_18] : memref<3x4x4x4xf32, #tpu.memory_space<vmem>>, vector<1x4x4x4xf32>
    %14 = vector.shape_cast %13 : vector<1x4x4x4xf32> to vector<4x4x4xf32>
    %cst_19 = arith.constant dense<0.000000e+00> : vector<4x8x4xf32>
    %15 = tpu.matmul %12, %14, %cst_19 {dimension_numbers = #tpu.dot_dimension_numbers<[2], [1], [1], [2], [0, 0, 0, 1, 1, 2], [0], [0]>} : vector<4x8x4xf32>, vector<4x4x4xf32>, vector<4x8x4xf32> -> vector<4x8x4xf32>
    %c1_20 = arith.constant 1 : index
    %c0_21 = arith.constant 0 : index
    %c0_22 = arith.constant 0 : index
    %c0_23 = arith.constant 0 : index
    %16 = vector.load %arg2[%c1_20, %c0_21, %c0_22, %c0_23] : memref<3x4x1x4xf32, #tpu.memory_space<vmem>>, vector<1x4x1x4xf32>
    %17 = vector.shape_cast %16 : vector<1x4x1x4xf32> to vector<4x1x4xf32>
    %18 = vector.broadcast %17 : vector<4x1x4xf32> to vector<4x8x4xf32>
    %19 = arith.addf %15, %18 : vector<4x8x4xf32>
    %c2 = arith.constant 2 : index
    %c0_24 = arith.constant 0 : index
    %c0_25 = arith.constant 0 : index
    %c0_26 = arith.constant 0 : index
    %20 = vector.load %arg0[%c2, %c0_24, %c0_25, %c0_26] : memref<3x4x8x4xf32, #tpu.memory_space<vmem>>, vector<1x4x8x4xf32>
    %21 = vector.shape_cast %20 : vector<1x4x8x4xf32> to vector<4x8x4xf32>
    %c2_27 = arith.constant 2 : index
    %c0_28 = arith.constant 0 : index
    %c0_29 = arith.constant 0 : index
    %c0_30 = arith.constant 0 : index
    %22 = vector.load %arg1[%c2_27, %c0_28, %c0_29, %c0_30] : memref<3x4x4x4xf32, #tpu.memory_space<vmem>>, vector<1x4x4x4xf32>
    %23 = vector.shape_cast %22 : vector<1x4x4x4xf32> to vector<4x4x4xf32>
    %cst_31 = arith.constant dense<0.000000e+00> : vector<4x8x4xf32>
    %24 = tpu.matmul %21, %23, %cst_31 {dimension_numbers = #tpu.dot_dimension_numbers<[2], [1], [1], [2], [0, 0, 0, 1, 1, 2], [0], [0]>} : vector<4x8x4xf32>, vector<4x4x4xf32>, vector<4x8x4xf32> -> vector<4x8x4xf32>
    %c2_32 = arith.constant 2 : index
    %c0_33 = arith.constant 0 : index
    %c0_34 = arith.constant 0 : index
    %c0_35 = arith.constant 0 : index
    %25 = vector.load %arg2[%c2_32, %c0_33, %c0_34, %c0_35] : memref<3x4x1x4xf32, #tpu.memory_space<vmem>>, vector<1x4x1x4xf32>
    %26 = vector.shape_cast %25 : vector<1x4x1x4xf32> to vector<4x1x4xf32>
    %27 = vector.broadcast %26 : vector<4x1x4xf32> to vector<4x8x4xf32>
    %28 = arith.addf %24, %27 : vector<4x8x4xf32>
    %cst_36 = arith.constant dense<0.000000e+00> : vector<4x8x8xf32>
    %29 = tpu.matmul %10, %19, %cst_36 {dimension_numbers = #tpu.dot_dimension_numbers<[2], [2], [1], [1], [0, 0, 0, 1, 1, 1], [0], [0]>} : vector<4x8x4xf32>, vector<4x8x4xf32>, vector<4x8x8xf32> -> vector<4x8x8xf32>
    %cst_37 = arith.constant dense<0xFF800000> : vector<4x8xf32>
    %30 = vector.multi_reduction <maximumf>, %29, %cst_37 [2] : vector<4x8x8xf32> to vector<4x8xf32>
    %31 = vector.shape_cast %30 : vector<4x8xf32> to vector<4x8x1xf32>
    %32 = vector.broadcast %31 : vector<4x8x1xf32> to vector<4x8x8xf32>
    %33 = arith.subf %29, %32 : vector<4x8x8xf32>
    %34 = math.exp %33 : vector<4x8x8xf32>
    %cst_38 = arith.constant dense<0.000000e+00> : vector<4x8xf32>
    %35 = vector.multi_reduction <add>, %34, %cst_38 [2] : vector<4x8x8xf32> to vector<4x8xf32>
    %36 = vector.shape_cast %35 : vector<4x8xf32> to vector<4x8x1xf32>
    %cst_39 = arith.constant dense<0.000000e+00> : vector<4x8x4xf32>
    %37 = tpu.matmul %34, %28, %cst_39 {dimension_numbers = #tpu.dot_dimension_numbers<[2], [1], [1], [2], [0, 0, 0, 1, 1, 2], [0], [0]>} : vector<4x8x8xf32>, vector<4x8x4xf32>, vector<4x8x4xf32> -> vector<4x8x4xf32>
    %38 = tpu.reciprocal %36 {approx = true} : vector<4x8x1xf32> -> vector<4x8x1xf32>
    %39 = arith.mulf %36, %38 : vector<4x8x1xf32>
    %cst_40 = arith.constant 2.000000e+00 : f32
    %40 = vector.broadcast %cst_40 : f32 to vector<4x8x1xf32>
    %41 = arith.subf %40, %39 : vector<4x8x1xf32>
    %42 = arith.mulf %38, %41 : vector<4x8x1xf32>
    %43 = vector.broadcast %42 : vector<4x8x1xf32> to vector<4x8x4xf32>
    %44 = arith.mulf %37, %43 : vector<4x8x4xf32>
    %c0_41 = arith.constant 0 : index
    %c0_42 = arith.constant 0 : index
    %c0_43 = arith.constant 0 : index
    %45 = vector.load %arg3[%c0_41, %c0_42, %c0_43] : memref<4x4x16xf32, #tpu.memory_space<vmem>>, vector<4x4x16xf32>
    %cst_44 = arith.constant dense<0.000000e+00> : vector<4x8x16xf32>
    %46 = tpu.matmul %44, %45, %cst_44 {dimension_numbers = #tpu.dot_dimension_numbers<[2], [1], [1], [2], [0, 0, 0, 1, 1, 2], [0], [0]>} : vector<4x8x4xf32>, vector<4x4x16xf32>, vector<4x8x16xf32> -> vector<4x8x16xf32>
    %cst_45 = arith.constant dense<0.000000e+00> : vector<8x16xf32>
    %47 = vector.multi_reduction <add>, %46, %cst_45 [0] : vector<4x8x16xf32> to vector<8x16xf32>
    %c0_46 = arith.constant 0 : index
    %c0_47 = arith.constant 0 : index
    %48 = vector.load %arg4[%c0_46, %c0_47] : memref<1x16xf32, #tpu.memory_space<vmem>>, vector<1x16xf32>
    %49 = vector.broadcast %48 : vector<1x16xf32> to vector<8x16xf32>
    %50 = arith.addf %47, %49 : vector<8x16xf32>
    %c0_48 = arith.constant 0 : index
    %c0_49 = arith.constant 0 : index
    %51 = vector.load %arg5[%c0_48, %c0_49] : memref<8x16xf32, #tpu.memory_space<vmem>>, vector<8x16xf32>
    tpu.vector_store %arg5[%c0_48, %c0_49], %50 {strides = array<i32>} : memref<8x16xf32, #tpu.memory_space<vmem>>, vector<8x16xf32>,
    return
  }
}

</mosaic_0001>

<llo_original>
// kernel: tpu_custom_call.1
$region0: #{tpu_custom_call.1}
  #allocation0 [shape = 'u32[]', space=smem, size = 0x4, offset = 0x4, fixed_abs, tag = 'smem constant byte address 0x4 - core index']
  #allocation1 [shape = 'u32[72,128]{1,0:T(1,128)}', space=vmem, size = 0x9000, scoped, tag = 'internal scratch']
  %s0 = inlined_call_operand.vmem [shape: f32[3,4,8,4], index: 0, kind: input, shape index: {}]
  %s1 = inlined_call_operand.vmem [shape: f32[3,4,4,4], index: 1, kind: input, shape index: {}]
  %s2 = inlined_call_operand.vmem [shape: f32[3,4,1,4], index: 2, kind: input, shape index: {}]
  %s3 = inlined_call_operand.vmem [shape: f32[4,4,16], index: 3, kind: input, shape index: {}]
  %s4 = inlined_call_operand.vmem [shape: f32[1,16], index: 4, kind: input, shape index: {}]
  %s5 = inlined_call_operand.hbm [shape: f32[8,16], index: 5, kind: output, shape index: {}]
  %s6 = sld [smem:[#allocation0]]
  $region30: #{tpu_custom_call.1} parent=0
    _
  %s8 = ssub.s32 1, %s6
  %s9 = scalar_select 0, %s8, %s6
  $region1: #{tpu_custom_call.1} parent=0
    #allocation2 [shape = 'u8[4096]{0}', space=vmem, size = 0x1000, scoped, tag = 'output window, operand 0, single buffered']
    #allocation3 [shape = 's32[1]{0}', space=sflag, size = 0x4, scoped, tag = 'scoped memory for tpu_custom_call.1']
    %10 = vsyncpa [#allocation3], 0
    // Predicated region
    $region2: #{tpu_custom_call.1} parent=1 // pred_check
      _
    $region3: #{tpu_custom_call.1} parent=1 // pred_check_branch
      %12 = sbr.rel (0) target = $region5
    $region4: #{tpu_custom_call.1} parent=1 // pred_region
      _
    $region5: #{tpu_custom_call.1} parent=1 // pred_fallthru
      _
    // Predicated region
    $region6: #{tpu_custom_call.1} parent=1 // pred_check
      _
    $region7: #{tpu_custom_call.1} parent=1 // pred_check_branch
      %14 = sbr.rel (0) target = $region9
    $region8: #{tpu_custom_call.1} parent=1 // pred_region
      _
    $region9: #{tpu_custom_call.1} parent=1 // pred_fallthru
      _
    // Predicated region
    $region10: #{tpu_custom_call.1} parent=1 // pred_check
      _
    $region11: #{tpu_custom_call.1} parent=1 // pred_check_branch
      %16 = sbr.rel (0) target = $region13
    $region12: #{tpu_custom_call.1} parent=1 // pred_region
      _
    $region13: #{tpu_custom_call.1} parent=1 // pred_fallthru
      _
    // Predicated region
    $region14: #{tpu_custom_call.1} parent=1 // pred_check
      _
    $region15: #{tpu_custom_call.1} parent=1 // pred_check_branch
      %18 = sbr.rel (0) target = $region17
    $region16: #{tpu_custom_call.1} parent=1 // pred_region
      _
    $region17: #{tpu_custom_call.1} parent=1 // pred_fallthru
      _
    // Predicated region
    $region18: #{tpu_custom_call.1} parent=1 // pred_check
      _
    $region19: #{tpu_custom_call.1} parent=1 // pred_check_branch
      %20 = sbr.rel (0) target = $region21
    $region20: #{tpu_custom_call.1} parent=1 // pred_region
      _
    $region21: #{tpu_custom_call.1} parent=1 // pred_fallthru
      _
    %v21 = vld [vmem:[%s0] sm:$0xff]
    %v22 = vld [vmem:[%s0 + $0x8] sm:$0xff]
    %v23 = vld [vmem:[%s0 + $0x10] sm:$0xff]
    %v24 = vld [vmem:[%s0 + $0x18] sm:$0xff]
    %v25 = vld [vmem:[%s1] sm:$0xf]
    %v26 = vld [vmem:[%s1 + $0x4] sm:$0xf]
    %v27 = vld [vmem:[%s1 + $0x8] sm:$0xf]
    %v28 = vld [vmem:[%s1 + $0xc] sm:$0xf]
    %v29 = vld [vmem:[%s2] sm:$0x1]
    %v30 = vld [vmem:[%s2 + $0x1] sm:$0x1]
    %v31 = vld [vmem:[%s2 + $0x2] sm:$0x1]
    %v32 = vld [vmem:[%s2 + $0x3] sm:$0x1]
    %v37 = vperm.slane %v29, 0
    %v38 = vperm.slane %v30, 0
    %v39 = vperm.slane %v31, 0
    %v40 = vperm.slane %v32, 0
    %vm45 = vcmask 31744
    %v47 = vsel %vm45, %v21, 0
    %vm49 = vcmask 1043456
    %v51 = vsel %vm49, %v25, 0
    %53 = vmatpush.msra.mxu0 0.0
    %54 = vmatpush.msra.mxu0 0.0
    %55 = vmatpush.msra.mxu0 0.0
    %56 = vmatpush.msra.mxu0 0.0
    %57 = vmatpush.msra.mxu0 0.0
    %58 = vmatpush.msra.mxu0 0.0
    %59 = vmatpush.msra.mxu0 0.0
    %60 = vmatpush.msra.mxu0 0.0
    %61 = vmatpush.msra.mxu0 0.0
    %62 = vmatpush.msra.mxu0 0.0
    %63 = vmatpush.msra.mxu0 0.0
    %64 = vmatpush.msra.mxu0 0.0
    %65 = vmatpush.msra.mxu0 0.0
    %66 = vmatpush.msra.mxu0 0.0
    %67 = vmatpush.msra.mxu0 0.0
    %68 = vmatpush.msra.mxu0 %v51
    %69 = vmatmul.f32.gmra.mxu0 %v47
    %v70 = vpop.f32.mrf.mxu0
    %v71 = vadd.f32 %v37, %v70
    %72 = vdwg.mxu0
    %v74 = vsel %vm45, %v22, 0
    %v77 = vsel %vm49, %v26, 0
    %79 = vmatpush.msra.mxu0 0.0
    %80 = vmatpush.msra.mxu0 0.0
    %81 = vmatpush.msra.mxu0 0.0
    %82 = vmatpush.msra.mxu0 0.0
    %83 = vmatpush.msra.mxu0 0.0
    %84 = vmatpush.msra.mxu0 0.0
    %85 = vmatpush.msra.mxu0 0.0
    %86 = vmatpush.msra.mxu0 0.0
    %87 = vmatpush.msra.mxu0 0.0
    %88 = vmatpush.msra.mxu0 0.0
    %89 = vmatpush.msra.mxu0 0.0
    %90 = vmatpush.msra.mxu0 0.0
    %91 = vmatpush.msra.mxu0 0.0
    %92 = vmatpush.msra.mxu0 0.0
    %93 = vmatpush.msra.mxu0 0.0
    %94 = vmatpush.msra.mxu0 %v77
    %95 = vmatmul.f32.gmra.mxu0 %v74
    %v96 = vpop.f32.mrf.mxu0
    %v97 = vadd.f32 %v38, %v96
    %98 = vdwg.mxu0
    %v100 = vsel %vm45, %v23, 0
    %v103 = vsel %vm49, %v27, 0
    %105 = vmatpush.msra.mxu0 0.0
    %106 = vmatpush.msra.mxu0 0.0
    %107 = vmatpush.msra.mxu0 0.0
    %108 = vmatpush.msra.mxu0 0.0
    %109 = vmatpush.msra.mxu0 0.0
    %110 = vmatpush.msra.mxu0 0.0
    %111 = vmatpush.msra.mxu0 0.0
    %112 = vmatpush.msra.mxu0 0.0
    %113 = vmatpush.msra.mxu0 0.0
    %114 = vmatpush.msra.mxu0 0.0
    %115 = vmatpush.msra.mxu0 0.0
    %116 = vmatpush.msra.mxu0 0.0
    %117 = vmatpush.msra.mxu0 0.0
    %118 = vmatpush.msra.mxu0 0.0
    %119 = vmatpush.msra.mxu0 0.0
    %120 = vmatpush.msra.mxu0 %v103
    %121 = vmatmul.f32.gmra.mxu0 %v100
    %v122 = vpop.f32.mrf.mxu0
    %v123 = vadd.f32 %v39, %v122
    %124 = vdwg.mxu0
    %v126 = vsel %vm45, %v24, 0
    %v129 = vsel %vm49, %v28, 0
    %131 = vmatpush.msra.mxu0 0.0
    %132 = vmatpush.msra.mxu0 0.0
    %133 = vmatpush.msra.mxu0 0.0
    %134 = vmatpush.msra.mxu0 0.0
    %135 = vmatpush.msra.mxu0 0.0
    %136 = vmatpush.msra.mxu0 0.0
    %137 = vmatpush.msra.mxu0 0.0
    %138 = vmatpush.msra.mxu0 0.0
    %139 = vmatpush.msra.mxu0 0.0
    %140 = vmatpush.msra.mxu0 0.0
    %141 = vmatpush.msra.mxu0 0.0
    %142 = vmatpush.msra.mxu0 0.0
    %143 = vmatpush.msra.mxu0 0.0
    %144 = vmatpush.msra.mxu0 0.0
    %145 = vmatpush.msra.mxu0 0.0
    %146 = vmatpush.msra.mxu0 %v129
    %147 = vmatmul.f32.gmra.mxu0 %v126
    %v148 = vpop.f32.mrf.mxu0
    %v149 = vadd.f32 %v40, %v148
    %150 = vdwg.mxu0
    %v151 = vmul.f32 %v71, 0.5
    %v152 = vmul.f32 %v97, 0.5
    %v153 = vmul.f32 %v123, 0.5
    %v154 = vmul.f32 %v149, 0.5
    %s155 = scalar_lea.vmem %s0, 32
    %v156 = vld [vmem:[%s155] sm:$0xff]
    %v157 = vld [vmem:[%s155 + $0x8] sm:$0xff]
    %v158 = vld [vmem:[%s155 + $0x10] sm:$0xff]
    %v159 = vld [vmem:[%s155 + $0x18] sm:$0xff]
    %s160 = scalar_lea.vmem %s1, 16
    %v161 = vld [vmem:[%s160] sm:$0xf]
    %v162 = vld [vmem:[%s160 + $0x4] sm:$0xf]
    %v163 = vld [vmem:[%s160 + $0x8] sm:$0xf]
    %v164 = vld [vmem:[%s160 + $0xc] sm:$0xf]
    %s165 = scalar_lea.vmem %s2, 4
    %v166 = vld [vmem:[%s165] sm:$0x1]
    %v167 = vld [vmem:[%s165 + $0x1] sm:$0x1]
    %v168 = vld [vmem:[%s165 + $0x2] sm:$0x1]
    %v169 = vld [vmem:[%s165 + $0x3] sm:$0x1]
    %v174 = vperm.slane %v166, 0
    %v175 = vperm.slane %v167, 0
    %v176 = vperm.slane %v168, 0
    %v177 = vperm.slane %v169, 0
    %v183 = vsel %vm45, %v156, 0
    %v186 = vsel %vm49, %v161, 0
    %188 = vmatpush.msra.mxu0 0.0
    %189 = vmatpush.msra.mxu0 0.0
    %190 = vmatpush.msra.mxu0 0.0
    %191 = vmatpush.msra.mxu0 0.0
    %192 = vmatpush.msra.mxu0 0.0
    %193 = vmatpush.msra.mxu0 0.0
    %194 = vmatpush.msra.mxu0 0.0
    %195 = vmatpush.msra.mxu0 0.0
    %196 = vmatpush.msra.mxu0 0.0
    %197 = vmatpush.msra.mxu0 0.0
    %198 = vmatpush.msra.mxu0 0.0
    %199 = vmatpush.msra.mxu0 0.0
    %200 = vmatpush.msra.mxu0 0.0
    %201 = vmatpush.msra.mxu0 0.0
    %202 = vmatpush.msra.mxu0 0.0
    %203 = vmatpush.msra.mxu0 %v186
    %204 = vmatmul.f32.gmra.mxu0 %v183
    %v205 = vpop.f32.mrf.mxu0
    %v206 = vadd.f32 %v174, %v205
    %207 = vdwg.mxu0
    %v209 = vsel %vm45, %v157, 0
    %v212 = vsel %vm49, %v162, 0
    %214 = vmatpush.msra.mxu0 0.0
    %215 = vmatpush.msra.mxu0 0.0
    %216 = vmatpush.msra.mxu0 0.0
    %217 = vmatpush.msra.mxu0 0.0
    %218 = vmatpush.msra.mxu0 0.0
    %219 = vmatpush.msra.mxu0 0.0
    %220 = vmatpush.msra.mxu0 0.0
    %221 = vmatpush.msra.mxu0 0.0
    %222 = vmatpush.msra.mxu0 0.0
    %223 = vmatpush.msra.mxu0 0.0
    %224 = vmatpush.msra.mxu0 0.0
    %225 = vmatpush.msra.mxu0 0.0
    %226 = vmatpush.msra.mxu0 0.0
    %227 = vmatpush.msra.mxu0 0.0
    %228 = vmatpush.msra.mxu0 0.0
    %229 = vmatpush.msra.mxu0 %v212
    %230 = vmatmul.f32.gmra.mxu0 %v209
    %v231 = vpop.f32.mrf.mxu0
    %v232 = vadd.f32 %v175, %v231
    %233 = vdwg.mxu0
    %v235 = vsel %vm45, %v158, 0
    %v238 = vsel %vm49, %v163, 0
    %240 = vmatpush.msra.mxu0 0.0
    %241 = vmatpush.msra.mxu0 0.0
    %242 = vmatpush.msra.mxu0 0.0
    %243 = vmatpush.msra.mxu0 0.0
    %244 = vmatpush.msra.mxu0 0.0
    %245 = vmatpush.msra.mxu0 0.0
    %246 = vmatpush.msra.mxu0 0.0
    %247 = vmatpush.msra.mxu0 0.0
    %248 = vmatpush.msra.mxu0 0.0
    %249 = vmatpush.msra.mxu0 0.0
    %250 = vmatpush.msra.mxu0 0.0
    %251 = vmatpush.msra.mxu0 0.0
    %252 = vmatpush.msra.mxu0 0.0
    %253 = vmatpush.msra.mxu0 0.0
    %254 = vmatpush.msra.mxu0 0.0
    %255 = vmatpush.msra.mxu0 %v238
    %256 = vmatmul.f32.gmra.mxu0 %v235
    %v257 = vpop.f32.mrf.mxu0
    %v258 = vadd.f32 %v176, %v257
    %259 = vdwg.mxu0
    %v261 = vsel %vm45, %v159, 0
    %v264 = vsel %vm49, %v164, 0
    %266 = vmatpush.msra.mxu0 0.0
    %267 = vmatpush.msra.mxu0 0.0
    %268 = vmatpush.msra.mxu0 0.0
    %269 = vmatpush.msra.mxu0 0.0
    %270 = vmatpush.msra.mxu0 0.0
    %271 = vmatpush.msra.mxu0 0.0
    %272 = vmatpush.msra.mxu0 0.0
    %273 = vmatpush.msra.mxu0 0.0
    %274 = vmatpush.msra.mxu0 0.0
    %275 = vmatpush.msra.mxu0 0.0
    %276 = vmatpush.msra.mxu0 0.0
    %277 = vmatpush.msra.mxu0 0.0
    %278 = vmatpush.msra.mxu0 0.0
    %279 = vmatpush.msra.mxu0 0.0
    %280 = vmatpush.msra.mxu0 0.0
    %281 = vmatpush.msra.mxu0 %v264
    %282 = vmatmul.f32.gmra.mxu0 %v261
    %v283 = vpop.f32.mrf.mxu0
    %v284 = vadd.f32 %v177, %v283
    %285 = vdwg.mxu0
    %s286 = scalar_lea.vmem %s0, 64
    %v287 = vld [vmem:[%s286] sm:$0xff]
    %v288 = vld [vmem:[%s286 + $0x8] sm:$0xff]
    %v289 = vld [vmem:[%s286 + $0x10] sm:$0xff]
    %v290 = vld [vmem:[%s286 + $0x18] sm:$0xff]
    %s291 = scalar_lea.vmem %s1, 32
    %v292 = vld [vmem:[%s291] sm:$0xf]
    %v293 = vld [vmem:[%s291 + $0x4] sm:$0xf]
    %v294 = vld [vmem:[%s291 + $0x8] sm:$0xf]
    %v295 = vld [vmem:[%s291 + $0xc] sm:$0xf]
    %s296 = scalar_lea.vmem %s2, 8
    %v297 = vld [vmem:[%s296] sm:$0x1]
    %v298 = vld [vmem:[%s296 + $0x1] sm:$0x1]
    %v299 = vld [vmem:[%s296 + $0x2] sm:$0x1]
    %v300 = vld [vmem:[%s296 + $0x3] sm:$0x1]
    %v305 = vperm.slane %v297, 0
    %v306 = vperm.slane %v298, 0
    %v307 = vperm.slane %v299, 0
    %v308 = vperm.slane %v300, 0
    %v314 = vsel %vm45, %v287, 0
    %v317 = vsel %vm49, %v292, 0
    %319 = vmatpush.msra.mxu0 0.0
    %320 = vmatpush.msra.mxu0 0.0
    %321 = vmatpush.msra.mxu0 0.0
    %322 = vmatpush.msra.mxu0 0.0
    %323 = vmatpush.msra.mxu0 0.0
    %324 = vmatpush.msra.mxu0 0.0
    %325 = vmatpush.msra.mxu0 0.0
    %326 = vmatpush.msra.mxu0 0.0
    %327 = vmatpush.msra.mxu0 0.0
    %328 = vmatpush.msra.mxu0 0.0
    %329 = vmatpush.msra.mxu0 0.0
    %330 = vmatpush.msra.mxu0 0.0
    %331 = vmatpush.msra.mxu0 0.0
    %332 = vmatpush.msra.mxu0 0.0
    %333 = vmatpush.msra.mxu0 0.0
    %334 = vmatpush.msra.mxu0 %v317
    %335 = vmatmul.f32.gmra.mxu0 %v314
    %v336 = vpop.f32.mrf.mxu0
    %v337 = vadd.f32 %v305, %v336
    %338 = vdwg.mxu0
    %v340 = vsel %vm45, %v288, 0
    %v343 = vsel %vm49, %v293, 0
    %345 = vmatpush.msra.mxu0 0.0
    %346 = vmatpush.msra.mxu0 0.0
    %347 = vmatpush.msra.mxu0 0.0
    %348 = vmatpush.msra.mxu0 0.0
    %349 = vmatpush.msra.mxu0 0.0
    %350 = vmatpush.msra.mxu0 0.0
    %351 = vmatpush.msra.mxu0 0.0
    %352 = vmatpush.msra.mxu0 0.0
    %353 = vmatpush.msra.mxu0 0.0
    %354 = vmatpush.msra.mxu0 0.0
    %355 = vmatpush.msra.mxu0 0.0
    %356 = vmatpush.msra.mxu0 0.0
    %357 = vmatpush.msra.mxu0 0.0
    %358 = vmatpush.msra.mxu0 0.0
    %359 = vmatpush.msra.mxu0 0.0
    %360 = vmatpush.msra.mxu0 %v343
    %361 = vmatmul.f32.gmra.mxu0 %v340
    %v362 = vpop.f32.mrf.mxu0
    %v363 = vadd.f32 %v306, %v362
    %364 = vdwg.mxu0
    %v366 = vsel %vm45, %v289, 0
    %v369 = vsel %vm49, %v294, 0
    %371 = vmatpush.msra.mxu0 0.0
    %372 = vmatpush.msra.mxu0 0.0
    %373 = vmatpush.msra.mxu0 0.0
    %374 = vmatpush.msra.mxu0 0.0
    %375 = vmatpush.msra.mxu0 0.0
    %376 = vmatpush.msra.mxu0 0.0
    %377 = vmatpush.msra.mxu0 0.0
    %378 = vmatpush.msra.mxu0 0.0
    %379 = vmatpush.msra.mxu0 0.0
    %380 = vmatpush.msra.mxu0 0.0
    %381 = vmatpush.msra.mxu0 0.0
    %382 = vmatpush.msra.mxu0 0.0
    %383 = vmatpush.msra.mxu0 0.0
    %384 = vmatpush.msra.mxu0 0.0
    %385 = vmatpush.msra.mxu0 0.0
    %386 = vmatpush.msra.mxu0 %v369
    %387 = vmatmul.f32.gmra.mxu0 %v366
    %v388 = vpop.f32.mrf.mxu0
    %v389 = vadd.f32 %v307, %v388
    %390 = vdwg.mxu0
    %v392 = vsel %vm45, %v290, 0
    %v395 = vsel %vm49, %v295, 0
    %397 = vmatpush.msra.mxu0 0.0
    %398 = vmatpush.msra.mxu0 0.0
    %399 = vmatpush.msra.mxu0 0.0
    %400 = vmatpush.msra.mxu0 0.0
    %401 = vmatpush.msra.mxu0 0.0
    %402 = vmatpush.msra.mxu0 0.0
    %403 = vmatpush.msra.mxu0 0.0
    %404 = vmatpush.msra.mxu0 0.0
    %405 = vmatpush.msra.mxu0 0.0
    %406 = vmatpush.msra.mxu0 0.0
    %407 = vmatpush.msra.mxu0 0.0
    %408 = vmatpush.msra.mxu0 0.0
    %409 = vmatpush.msra.mxu0 0.0
    %410 = vmatpush.msra.mxu0 0.0
    %411 = vmatpush.msra.mxu0 0.0
    %412 = vmatpush.msra.mxu0 %v395
    %413 = vmatmul.f32.gmra.mxu0 %v392
    %v414 = vpop.f32.mrf.mxu0
    %v415 = vadd.f32 %v308, %v414
    %416 = vdwg.mxu0
    %v418 = vsel %vm45, %v151, 0
    %v421 = vsel %vm45, %v206, 0
    %423 = vmatpush.xpose.msra.mxu0 0.0
    %424 = vmatpush.xpose.msra.mxu0 0.0
    %425 = vmatpush.xpose.msra.mxu0 0.0
    %426 = vmatpush.xpose.msra.mxu0 0.0
    %427 = vmatpush.xpose.msra.mxu0 0.0
    %428 = vmatpush.xpose.msra.mxu0 0.0
    %429 = vmatpush.xpose.msra.mxu0 0.0
    %430 = vmatpush.xpose.msra.mxu0 0.0
    %431 = vmatpush.xpose.msra.mxu0 0.0
    %432 = vmatpush.xpose.msra.mxu0 0.0
    %433 = vmatpush.xpose.msra.mxu0 0.0
    %434 = vmatpush.xpose.msra.mxu0 0.0
    %435 = vmatpush.xpose.msra.mxu0 0.0
    %436 = vmatpush.xpose.msra.mxu0 0.0
    %437 = vmatpush.xpose.msra.mxu0 0.0
    %438 = vmatpush.xpose.msra.mxu0 %v421
    %439 = vmatmul.f32.gmra.mxu0 %v418
    %v440 = vpop.f32.mrf.mxu0
    %v441 = vadd.f32 0.0, %v440
    %442 = vdwg.mxu0
    %v444 = vsel %vm45, %v152, 0
    %v447 = vsel %vm45, %v232, 0
    %449 = vmatpush.xpose.msra.mxu0 0.0
    %450 = vmatpush.xpose.msra.mxu0 0.0
    %451 = vmatpush.xpose.msra.mxu0 0.0
    %452 = vmatpush.xpose.msra.mxu0 0.0
    %453 = vmatpush.xpose.msra.mxu0 0.0
    %454 = vmatpush.xpose.msra.mxu0 0.0
    %455 = vmatpush.xpose.msra.mxu0 0.0
    %456 = vmatpush.xpose.msra.mxu0 0.0
    %457 = vmatpush.xpose.msra.mxu0 0.0
    %458 = vmatpush.xpose.msra.mxu0 0.0
    %459 = vmatpush.xpose.msra.mxu0 0.0
    %460 = vmatpush.xpose.msra.mxu0 0.0
    %461 = vmatpush.xpose.msra.mxu0 0.0
    %462 = vmatpush.xpose.msra.mxu0 0.0
    %463 = vmatpush.xpose.msra.mxu0 0.0
    %464 = vmatpush.xpose.msra.mxu0 %v447
    %465 = vmatmul.f32.gmra.mxu0 %v444
    %v466 = vpop.f32.mrf.mxu0
    %v467 = vadd.f32 0.0, %v466
    %468 = vdwg.mxu0
    %v470 = vsel %vm45, %v153, 0
    %v473 = vsel %vm45, %v258, 0
    %475 = vmatpush.xpose.msra.mxu0 0.0
    %476 = vmatpush.xpose.msra.mxu0 0.0
    %477 = vmatpush.xpose.msra.mxu0 0.0
    %478 = vmatpush.xpose.msra.mxu0 0.0
    %479 = vmatpush.xpose.msra.mxu0 0.0
    %480 = vmatpush.xpose.msra.mxu0 0.0
    %481 = vmatpush.xpose.msra.mxu0 0.0
    %482 = vmatpush.xpose.msra.mxu0 0.0
    %483 = vmatpush.xpose.msra.mxu0 0.0
    %484 = vmatpush.xpose.msra.mxu0 0.0
    %485 = vmatpush.xpose.msra.mxu0 0.0
    %486 = vmatpush.xpose.msra.mxu0 0.0
    %487 = vmatpush.xpose.msra.mxu0 0.0
    %488 = vmatpush.xpose.msra.mxu0 0.0
    %489 = vmatpush.xpose.msra.mxu0 0.0
    %490 = vmatpush.xpose.msra.mxu0 %v473
    %491 = vmatmul.f32.gmra.mxu0 %v470
    %v492 = vpop.f32.mrf.mxu0
    %v493 = vadd.f32 0.0, %v492
    %494 = vdwg.mxu0
    %v496 = vsel %vm45, %v154, 0
    %v499 = vsel %vm45, %v284, 0
    %501 = vmatpush.xpose.msra.mxu0 0.0
    %502 = vmatpush.xpose.msra.mxu0 0.0
    %503 = vmatpush.xpose.msra.mxu0 0.0
    %504 = vmatpush.xpose.msra.mxu0 0.0
    %505 = vmatpush.xpose.msra.mxu0 0.0
    %506 = vmatpush.xpose.msra.mxu0 0.0
    %507 = vmatpush.xpose.msra.mxu0 0.0
    %508 = vmatpush.xpose.msra.mxu0 0.0
    %509 = vmatpush.xpose.msra.mxu0 0.0
    %510 = vmatpush.xpose.msra.mxu0 0.0
    %511 = vmatpush.xpose.msra.mxu0 0.0
    %512 = vmatpush.xpose.msra.mxu0 0.0
    %513 = vmatpush.xpose.msra.mxu0 0.0
    %514 = vmatpush.xpose.msra.mxu0 0.0
    %515 = vmatpush.xpose.msra.mxu0 0.0
    %516 = vmatpush.xpose.msra.mxu0 %v499
    %517 = vmatmul.f32.gmra.mxu0 %v496
    %v518 = vpop.f32.mrf.mxu0
    %v519 = vadd.f32 0.0, %v518
    %520 = vdwg.mxu0
    %vm521 = vcmask 64512
    %v522 = vsel %vm521, %v441, -inf
    %523 = vmax.xlane.f32.xlu0 %v522
    %v524 = vpop.xlane.xlu0 %523
    %v525 = vsel %vm521, %v467, -inf
    %526 = vmax.xlane.f32.xlu0 %v525
    %v527 = vpop.xlane.xlu0 %526
    %v528 = vsel %vm521, %v493, -inf
    %529 = vmax.xlane.f32.xlu0 %v528
    %v530 = vpop.xlane.xlu0 %529
    %v531 = vsel %vm521, %v519, -inf
    %532 = vmax.xlane.f32.xlu0 %v531
    %v533 = vpop.xlane.xlu0 %532
    %v534 = vsub.f32 %v441, %v524
    %v535 = vsub.f32 %v467, %v527
    %v536 = vsub.f32 %v493, %v530
    %v537 = vsub.f32 %v519, %v533
    %v538 = vmul.f32 %v534, 1.442695
    %v539 = vpow.pop %v538
    %v540 = vmul.f32 %v535, 1.442695
    %v541 = vpow.pop %v540
    %v542 = vmul.f32 %v536, 1.442695
    %v543 = vpow.pop %v542
    %v544 = vmul.f32 %v537, 1.442695
    %v545 = vpow.pop %v544
    %v546 = vsel %vm521, %v539, 0.0
    %547 = vadd.xlane.f32.xlu0 %v546
    %v548 = vpop.xlane.xlu0 %547
    %v549 = vsel %vm521, %v541, 0.0
    %550 = vadd.xlane.f32.xlu0 %v549
    %v551 = vpop.xlane.xlu0 %550
    %v552 = vsel %vm521, %v543, 0.0
    %553 = vadd.xlane.f32.xlu0 %v552
    %v554 = vpop.xlane.xlu0 %553
    %v555 = vsel %vm521, %v545, 0.0
    %556 = vadd.xlane.f32.xlu0 %v555
    %v557 = vpop.xlane.xlu0 %556
    %v559 = vsel %vm521, %v539, 0
    %561 = vmatpush.msra.mxu0 0.0
    %562 = vmatpush.msra.mxu0 0.0
    %563 = vmatpush.msra.mxu0 0.0
    %564 = vmatpush.msra.mxu0 0.0
    %565 = vmatpush.msra.mxu0 0.0
    %566 = vmatpush.msra.mxu0 0.0
    %567 = vmatpush.msra.mxu0 0.0
    %568 = vmatpush.msra.mxu0 0.0
    %569 = vmatpush.msra.mxu0 0.0
    %570 = vmatpush.msra.mxu0 0.0
    %571 = vmatpush.msra.mxu0 0.0
    %572 = vmatpush.msra.mxu0 0.0
    %573 = vmatpush.msra.mxu0 0.0
    %574 = vmatpush.msra.mxu0 0.0
    %575 = vmatpush.msra.mxu0 0.0
    %576 = vmatpush.msra.mxu0 %v337
    %577 = vmatmul.f32.gmra.mxu0 %v559
    %v578 = vpop.f32.mrf.mxu0
    %v579 = vadd.f32 0.0, %v578
    %580 = vdwg.mxu0
    %v582 = vsel %vm521, %v541, 0
    %584 = vmatpush.msra.mxu0 0.0
    %585 = vmatpush.msra.mxu0 0.0
    %586 = vmatpush.msra.mxu0 0.0
    %587 = vmatpush.msra.mxu0 0.0
    %588 = vmatpush.msra.mxu0 0.0
    %589 = vmatpush.msra.mxu0 0.0
    %590 = vmatpush.msra.mxu0 0.0
    %591 = vmatpush.msra.mxu0 0.0
    %592 = vmatpush.msra.mxu0 0.0
    %593 = vmatpush.msra.mxu0 0.0
    %594 = vmatpush.msra.mxu0 0.0
    %595 = vmatpush.msra.mxu0 0.0
    %596 = vmatpush.msra.mxu0 0.0
    %597 = vmatpush.msra.mxu0 0.0
    %598 = vmatpush.msra.mxu0 0.0
    %599 = vmatpush.msra.mxu0 %v363
    %600 = vmatmul.f32.gmra.mxu0 %v582
    %v601 = vpop.f32.mrf.mxu0
    %v602 = vadd.f32 0.0, %v601
    %603 = vdwg.mxu0
    %v605 = vsel %vm521, %v543, 0
    %607 = vmatpush.msra.mxu0 0.0
    %608 = vmatpush.msra.mxu0 0.0
    %609 = vmatpush.msra.mxu0 0.0
    %610 = vmatpush.msra.mxu0 0.0
    %611 = vmatpush.msra.mxu0 0.0
    %612 = vmatpush.msra.mxu0 0.0
    %613 = vmatpush.msra.mxu0 0.0
    %614 = vmatpush.msra.mxu0 0.0
    %615 = vmatpush.msra.mxu0 0.0
    %616 = vmatpush.msra.mxu0 0.0
    %617 = vmatpush.msra.mxu0 0.0
    %618 = vmatpush.msra.mxu0 0.0
    %619 = vmatpush.msra.mxu0 0.0
    %620 = vmatpush.msra.mxu0 0.0
    %621 = vmatpush.msra.mxu0 0.0
    %622 = vmatpush.msra.mxu0 %v389
    %623 = vmatmul.f32.gmra.mxu0 %v605
    %v624 = vpop.f32.mrf.mxu0
    %v625 = vadd.f32 0.0, %v624
    %626 = vdwg.mxu0
    %v628 = vsel %vm521, %v545, 0
    %630 = vmatpush.msra.mxu0 0.0
    %631 = vmatpush.msra.mxu0 0.0
    %632 = vmatpush.msra.mxu0 0.0
    %633 = vmatpush.msra.mxu0 0.0
    %634 = vmatpush.msra.mxu0 0.0
    %635 = vmatpush.msra.mxu0 0.0
    %636 = vmatpush.msra.mxu0 0.0
    %637 = vmatpush.msra.mxu0 0.0
    %638 = vmatpush.msra.mxu0 0.0
    %639 = vmatpush.msra.mxu0 0.0
    %640 = vmatpush.msra.mxu0 0.0
    %641 = vmatpush.msra.mxu0 0.0
    %642 = vmatpush.msra.mxu0 0.0
    %643 = vmatpush.msra.mxu0 0.0
    %644 = vmatpush.msra.mxu0 0.0
    %645 = vmatpush.msra.mxu0 %v415
    %646 = vmatmul.f32.gmra.mxu0 %v628
    %v647 = vpop.f32.mrf.mxu0
    %v648 = vadd.f32 0.0, %v647
    %649 = vdwg.mxu0
    %v650 = vrcp.pop %v548
    %v651 = vrcp.pop %v551
    %v652 = vrcp.pop %v554
    %v653 = vrcp.pop %v557
    %v654 = vmul.f32 %v548, %v650
    %v655 = vmul.f32 %v551, %v651
    %v656 = vmul.f32 %v554, %v652
    %v657 = vmul.f32 %v557, %v653
    %v658 = vsub.f32 2.0, %v654
    %v659 = vsub.f32 2.0, %v655
    %v660 = vsub.f32 2.0, %v656
    %v661 = vsub.f32 2.0, %v657
    %v662 = vmul.f32 %v650, %v658
    %v663 = vmul.f32 %v651, %v659
    %v664 = vmul.f32 %v652, %v660
    %v665 = vmul.f32 %v653, %v661
    %v666 = vmul.f32 %v579, %v662
    %v667 = vmul.f32 %v602, %v663
    %v668 = vmul.f32 %v625, %v664
    %v669 = vmul.f32 %v648, %v665
    %v670 = vld [vmem:[%s3] sm:$0xf]
    %v671 = vld [vmem:[%s3 + $0x4] sm:$0xf]
    %v672 = vld [vmem:[%s3 + $0x8] sm:$0xf]
    %v673 = vld [vmem:[%s3 + $0xc] sm:$0xf]
    %v675 = vsel %vm45, %v666, 0
    %v678 = vsel %vm49, %v670, 0
    %680 = vmatpush.msra.mxu0 0.0
    %681 = vmatpush.msra.mxu0 0.0
    %682 = vmatpush.msra.mxu0 0.0
    %683 = vmatpush.msra.mxu0 0.0
    %684 = vmatpush.msra.mxu0 0.0
    %685 = vmatpush.msra.mxu0 0.0
    %686 = vmatpush.msra.mxu0 0.0
    %687 = vmatpush.msra.mxu0 0.0
    %688 = vmatpush.msra.mxu0 0.0
    %689 = vmatpush.msra.mxu0 0.0
    %690 = vmatpush.msra.mxu0 0.0
    %691 = vmatpush.msra.mxu0 0.0
    %692 = vmatpush.msra.mxu0 0.0
    %693 = vmatpush.msra.mxu0 0.0
    %694 = vmatpush.msra.mxu0 0.0
    %695 = vmatpush.msra.mxu0 %v678
    %696 = vmatmul.f32.gmra.mxu0 %v675
    %v697 = vpop.f32.mrf.mxu0
    %v698 = vadd.f32 0.0, %v697
    %699 = vdwg.mxu0
    %v701 = vsel %vm45, %v667, 0
    %v704 = vsel %vm49, %v671, 0
    %706 = vmatpush.msra.mxu0 0.0
    %707 = vmatpush.msra.mxu0 0.0
    %708 = vmatpush.msra.mxu0 0.0
    %709 = vmatpush.msra.mxu0 0.0
    %710 = vmatpush.msra.mxu0 0.0
    %711 = vmatpush.msra.mxu0 0.0
    %712 = vmatpush.msra.mxu0 0.0
    %713 = vmatpush.msra.mxu0 0.0
    %714 = vmatpush.msra.mxu0 0.0
    %715 = vmatpush.msra.mxu0 0.0
    %716 = vmatpush.msra.mxu0 0.0
    %717 = vmatpush.msra.mxu0 0.0
    %718 = vmatpush.msra.mxu0 0.0
    %719 = vmatpush.msra.mxu0 0.0
    %720 = vmatpush.msra.mxu0 0.0
    %721 = vmatpush.msra.mxu0 %v704
    %722 = vmatmul.f32.gmra.mxu0 %v701
    %v723 = vpop.f32.mrf.mxu0
    %v724 = vadd.f32 0.0, %v723
    %725 = vdwg.mxu0
    %v727 = vsel %vm45, %v668, 0
    %v730 = vsel %vm49, %v672, 0
    %732 = vmatpush.msra.mxu0 0.0
    %733 = vmatpush.msra.mxu0 0.0
    %734 = vmatpush.msra.mxu0 0.0
    %735 = vmatpush.msra.mxu0 0.0
    %736 = vmatpush.msra.mxu0 0.0
    %737 = vmatpush.msra.mxu0 0.0
    %738 = vmatpush.msra.mxu0 0.0
    %739 = vmatpush.msra.mxu0 0.0
    %740 = vmatpush.msra.mxu0 0.0
    %741 = vmatpush.msra.mxu0 0.0
    %742 = vmatpush.msra.mxu0 0.0
    %743 = vmatpush.msra.mxu0 0.0
    %744 = vmatpush.msra.mxu0 0.0
    %745 = vmatpush.msra.mxu0 0.0
    %746 = vmatpush.msra.mxu0 0.0
    %747 = vmatpush.msra.mxu0 %v730
    %748 = vmatmul.f32.gmra.mxu0 %v727
    %v749 = vpop.f32.mrf.mxu0
    %v750 = vadd.f32 0.0, %v749
    %751 = vdwg.mxu0
    %v753 = vsel %vm45, %v669, 0
    %v756 = vsel %vm49, %v673, 0
    %758 = vmatpush.msra.mxu0 0.0
    %759 = vmatpush.msra.mxu0 0.0
    %760 = vmatpush.msra.mxu0 0.0
    %761 = vmatpush.msra.mxu0 0.0
    %762 = vmatpush.msra.mxu0 0.0
    %763 = vmatpush.msra.mxu0 0.0
    %764 = vmatpush.msra.mxu0 0.0
    %765 = vmatpush.msra.mxu0 0.0
    %766 = vmatpush.msra.mxu0 0.0
    %767 = vmatpush.msra.mxu0 0.0
    %768 = vmatpush.msra.mxu0 0.0
    %769 = vmatpush.msra.mxu0 0.0
    %770 = vmatpush.msra.mxu0 0.0
    %771 = vmatpush.msra.mxu0 0.0
    %772 = vmatpush.msra.mxu0 0.0
    %773 = vmatpush.msra.mxu0 %v756
    %774 = vmatmul.f32.gmra.mxu0 %v753
    %v775 = vpop.f32.mrf.mxu0
    %v776 = vadd.f32 0.0, %v775
    %777 = vdwg.mxu0
    %vm778 = vcmask 130048
    %v779 = vsel %vm778, %v698, 0.0
    %v780 = vsel %vm778, %v724, 0.0
    %v781 = vadd.f32 %v779, %v780
    %v782 = vsel %vm778, %v750, 0.0
    %v783 = vadd.f32 %v781, %v782
    %v784 = vsel %vm778, %v776, 0.0
    %v785 = vadd.f32 %v783, %v784
    %v786 = vld [vmem:[%s4] sm:$0x1]
    %v788 = vperm.slane %v786, 0
    %v790 = vadd.f32 %v785, %v788
    %791 = vst.msk [vmem:[#allocation2] sm:$0xff] %vm778, %v790
    // Predicated region
    $region22: #{tpu_custom_call.1} parent=1 // pred_check
      _
    $region23: #{tpu_custom_call.1} parent=1 // pred_check_branch
      %793 = sbr.rel (0) target = $region25
    $region24: #{tpu_custom_call.1} parent=1 // pred_region
      %795 = vsyncadd [#allocation3], 0
      %s797 = sshll.u32 [#allocation2], 4
      %s798 = int_to_ptr.vmem [resolvable:$true] %s797
      %s799 = sshll.u32 %s5, 4
      %s800 = int_to_ptr.hbm [resolvable:$true] %s799
      %802 = dma.vmem_to_hbm [thread:$0]  %s798, 128, %s800, [#allocation3]
    $region25: #{tpu_custom_call.1} parent=1 // pred_fallthru
      _
    // Predicated region
    $region26: #{tpu_custom_call.1} parent=1 // pred_check
      _
    $region27: #{tpu_custom_call.1} parent=1 // pred_check_branch
      %804 = sbr.rel (0) target = $region29
    $region28: #{tpu_custom_call.1} parent=1 // pred_region
      %806 = dma.done [#allocation3], 128
    $region29: #{tpu_custom_call.1} parent=1 // pred_fallthru
      _
    %807 = vsyncpa [#allocation3], 1

</llo_original>
